<compile_context>
chip_gen: v6e
topology: v6e:2x2x1
jax: 0.10.0
libtpu: 0.0.40
codegen_flags: <defaults>
</compile_context>

<pallas_src>
import jax
import jax.numpy as jnp
from jax.experimental import pallas as pl
from jax.experimental.pallas import tpu as pltpu

LANE = 128               # lane tile (contraction / output padding width)

NUM_LAYERS = 3
INPUT_SIZE = 64          # x.view(-1) must have exactly this many elements
HIDDEN = 5
OUT = 2


def fused_linear_kernel(x_ref, w_ref, b_ref, o_ref):
    # (1, 64) @ (64, 128) -> (1, 128): one MXU pass (K=64 is handled natively).
    y = jnp.dot(
        x_ref[...],
        w_ref[...],
        preferred_element_type=jnp.float32,
        precision=jax.lax.Precision.HIGHEST,   # full-f32 multi-pass MXU path
    )
    y = y + b_ref[...]                         # bias add co-issues on the VPU
    o_ref[...] = y[:, : o_ref.shape[1]]        # write the (1, OUT) result directly


def init_params(key, num_layers, input_size):
    """Deterministic PyTorch-style init: U(-1/sqrt(fan_in), 1/sqrt(fan_in))."""
    params = {}
    keys = jax.random.split(key, 2 * (num_layers + 2))

    def lin(kw, kb, fan_in, fan_out):
        bound = 1.0 / jnp.sqrt(jnp.float32(fan_in))
        w = jax.random.uniform(kw, (fan_out, fan_in), jnp.float32, -bound, bound)
        b = jax.random.uniform(kb, (fan_out,), jnp.float32, -bound, bound)
        return w, b

    ki = iter(range(len(keys)))
    params["w1"], params["b1"] = lin(keys[next(ki)], keys[next(ki)], input_size, HIDDEN)
    params["wm"], params["bm"] = [], []
    for _ in range(num_layers):
        w, b = lin(keys[next(ki)], keys[next(ki)], HIDDEN, HIDDEN)
        params["wm"].append(w)
        params["bm"].append(b)
    params["wo"], params["bo"] = lin(keys[next(ki)], keys[next(ki)], HIDDEN, OUT)
    return params


def fold_and_pad_params(params, input_size):
    """Fold the whole activation-free linear chain into one weight + bias.

    Done ONCE at init time.  Returns:
      w_fold : (input_size, LANE) f32, real (input_size, OUT) block in cols [0:OUT)
      b_fold : (1, LANE)          f32, real (OUT,) bias in lanes [0:OUT)
    such that  out = x_flat @ w_fold[:, :OUT] + b_fold[0, :OUT]
    equals  output( middle_n( ... middle_1( linear_1(x) ) ... ) ).
    """
    w = params["w1"].T.astype(jnp.float32)          # (input_size, HIDDEN)
    b = params["b1"].astype(jnp.float32)            # (HIDDEN,)
    for wm, bm in zip(params["wm"], params["bm"]):
        w = w @ wm.T
        b = b @ wm.T + bm
    w = w @ params["wo"].T                          # (input_size, OUT)
    b = b @ params["wo"].T + params["bo"]           # (OUT,)

    w_fold = jnp.zeros((input_size, LANE), jnp.float32).at[:, :OUT].set(w)
    b_fold = jnp.zeros((1, LANE), jnp.float32).at[0, :OUT].set(b)
    return w_fold, b_fold


@jax.jit
def test_net_forward(x, w_fold, b_fold):
    """Equivalent of test_net.forward(x): flatten x, run the fused linear chain."""
    xf = x.reshape(1, -1).astype(jnp.float32)       # raw flattened x, no padding
    assert xf.shape == (1, INPUT_SIZE), "x.view(-1) must match input_size"

    vmem = pl.BlockSpec(memory_space=pltpu.MemorySpace.VMEM)
    out = pl.pallas_call(
        fused_linear_kernel,
        out_shape=jax.ShapeDtypeStruct((1, OUT), jnp.float32),
        in_specs=[vmem, vmem, vmem],
        out_specs=vmem,
    )(xf, w_fold, b_fold)

    return out[0]                                   # (OUT,)


def reference_forward(x, params):
    h = x.reshape(-1).astype(jnp.float32)
    h = h @ params["w1"].T + params["b1"]
    for w, b in zip(params["wm"], params["bm"]):
        h = h @ w.T + b
    return h @ params["wo"].T + params["bo"]


if __name__ == "__main__":
    key = jax.random.PRNGKey(0)
    kx, kp = jax.random.split(key)

    # x of shape (2, 32) -> view(-1) has 64 elements == input_size
    x = jax.random.normal(kx, (2, 32), jnp.float32)
    params = init_params(kp, NUM_LAYERS, INPUT_SIZE)

    # One-time parameter preprocessing (folding + padding) — NOT per forward.
    w_fold, b_fold = jax.block_until_ready(fold_and_pad_params(params, INPUT_SIZE))

    out = jax.block_until_ready(test_net_forward(x, w_fold, b_fold))

    ref = reference_forward(x, params)
    assert out.shape == (OUT,)
    assert jnp.allclose(out, ref, atol=1e-5, rtol=1e-5), (out, ref)

    print("KERNEL_OK")
</pallas_src>

<mosaic_0001>
module attributes {stable_mosaic.version = 11 : i64} {
  func.func @fused_linear_kernel(%arg0: memref<1x64xf32, #tpu.memory_space<vmem>>, %arg1: memref<64x128xf32, #tpu.memory_space<vmem>>, %arg2: memref<1x128xf32, #tpu.memory_space<vmem>>, %arg3: memref<1x2xf32, #tpu.memory_space<vmem>>) attributes {dimension_semantics = [], scalar_prefetch = 0 : i64, scratch_operands = 0 : i64, tpu.core_type = #tpu.core_type<tc>} {
    %c0 = arith.constant 0 : index
    %c0_0 = arith.constant 0 : index
    %0 = vector.load %arg0[%c0, %c0_0] : memref<1x64xf32, #tpu.memory_space<vmem>>, vector<1x64xf32>
    %c0_1 = arith.constant 0 : index
    %c0_2 = arith.constant 0 : index
    %1 = vector.load %arg1[%c0_1, %c0_2] : memref<64x128xf32, #tpu.memory_space<vmem>>, vector<64x128xf32>
    %cst = arith.constant dense<0.000000e+00> : vector<1x128xf32>
    %2 = tpu.matmul %0, %1, %cst {dimension_numbers = #tpu.dot_dimension_numbers<[1], [0], [0], [1], [0, 0, 1, 1], [], []>, precision = #tpu.contract_precision<fp32>} : vector<1x64xf32>, vector<64x128xf32>, vector<1x128xf32> -> vector<1x128xf32>
    %c0_3 = arith.constant 0 : index
    %c0_4 = arith.constant 0 : index
    %3 = vector.load %arg2[%c0_3, %c0_4] : memref<1x128xf32, #tpu.memory_space<vmem>>, vector<1x128xf32>
    %4 = arith.addf %2, %3 : vector<1x128xf32>
    %5 = vector.extract_strided_slice %4 {offsets = [0, 0], sizes = [1, 2], strides = [1, 1]} : vector<1x128xf32> to vector<1x2xf32>
    %c0_5 = arith.constant 0 : index
    %c0_6 = arith.constant 0 : index
    %6 = vector.load %arg3[%c0_5, %c0_6] : memref<1x2xf32, #tpu.memory_space<vmem>>, vector<1x2xf32>
    tpu.vector_store %arg3[%c0_5, %c0_6], %5 {strides = array<i32>} : memref<1x2xf32, #tpu.memory_space<vmem>>, vector<1x2xf32>,
    return
  }
}

</mosaic_0001>

<llo_original>
// kernel: test_net_forward.1
$region0: #{test_net_forward.1}
  #allocation0 [shape = 'u32[]', space=smem, size = 0x4, offset = 0x4, fixed_abs, tag = 'smem constant byte address 0x4 - core index']
  #allocation1 [shape = 'u32[144,128]{1,0:T(1,128)}', space=vmem, size = 0x12000, scoped, tag = 'internal scratch']
  %s0 = inlined_call_operand.vmem [shape: f32[1,64], index: 0, kind: input, shape index: {}]
  %s1 = inlined_call_operand.hbm [shape: f32[64,128], index: 1, kind: input, shape index: {}]
  %s2 = inlined_call_operand.vmem [shape: f32[1,128], index: 2, kind: input, shape index: {}]
  %s3 = inlined_call_operand.hbm [shape: f32[1,2], index: 3, kind: output, shape index: {}]
  %s4 = sld [smem:[#allocation0]]
  $region26: #{test_net_forward.1} parent=0
    _
  %s6 = ssub.s32 1, %s4
  %s7 = scalar_select 0, %s6, %s4
  $region1: #{test_net_forward.1} parent=0
    #allocation2 [shape = 'u8[32768]{0}', space=vmem, size = 0x8000, scoped, tag = 'input window, operand 1, single buffered']
    #allocation3 [shape = 's32[1]{0}', space=sflag, size = 0x4, scoped, tag = 'scoped memory for test_net_forward.1']
    #allocation4 [shape = 's32[1]{0}', space=sflag, size = 0x4, scoped, tag = 'scoped memory for test_net_forward.1']
    #allocation5 [shape = 'u8[512]{0}', space=vmem, size = 0x400, scoped, tag = 'output window, operand 0, single buffered']
    %8 = vsyncpa [#allocation3], 0
    %9 = vsyncpa [#allocation4], 0
    // Predicated region
    $region2: #{test_net_forward.1} parent=1 // pred_check
      _
    $region3: #{test_net_forward.1} parent=1 // pred_check_branch
      %11 = sbr.rel (0) target = $region5
    $region4: #{test_net_forward.1} parent=1 // pred_region
      _
    $region5: #{test_net_forward.1} parent=1 // pred_fallthru
      _
    // Predicated region
    $region6: #{test_net_forward.1} parent=1 // pred_check
      _
    $region7: #{test_net_forward.1} parent=1 // pred_check_branch
      %13 = sbr.rel (0) target = $region9
    $region8: #{test_net_forward.1} parent=1 // pred_region
      %s15 = ssub.s32 1024, 1024
      %16 = vsyncadd [#allocation3], %s15
      %s17 = sshll.u32 [#allocation2], 4
      %s18 = int_to_ptr.vmem [resolvable:$true] %s17
      %23 = dma.hbm_to_vmem [thread:$0]  %s1, 1024, %s18, [#allocation3], 128, 128, 8
    $region9: #{test_net_forward.1} parent=1 // pred_fallthru
      _
    // Predicated region
    $region10: #{test_net_forward.1} parent=1 // pred_check
      _
    $region11: #{test_net_forward.1} parent=1 // pred_check_branch
      %25 = sbr.rel (0) target = $region13
    $region12: #{test_net_forward.1} parent=1 // pred_region
      _
    $region13: #{test_net_forward.1} parent=1 // pred_fallthru
      _
    // Predicated region
    $region14: #{test_net_forward.1} parent=1 // pred_check
      _
    $region15: #{test_net_forward.1} parent=1 // pred_check_branch
      %27 = sbr.rel (0) target = $region17
    $region16: #{test_net_forward.1} parent=1 // pred_region
      %28 = dma.done [#allocation3], 1024
    $region17: #{test_net_forward.1} parent=1 // pred_fallthru
      _
    %v29 = vld [vmem:[%s0] sm:$0x1]
    %v30 = vld [vmem:[#allocation2] sm:$0xff]
    %v31 = vld [vmem:[#allocation2 + $0x8] sm:$0xff]
    %v32 = vld [vmem:[#allocation2 + $0x10] sm:$0xff]
    %v33 = vld [vmem:[#allocation2 + $0x18] sm:$0xff]
    %v34 = vld [vmem:[#allocation2 + $0x20] sm:$0xff]
    %v35 = vld [vmem:[#allocation2 + $0x28] sm:$0xff]
    %v36 = vld [vmem:[#allocation2 + $0x30] sm:$0xff]
    %v37 = vld [vmem:[#allocation2 + $0x38] sm:$0xff]
    %v38 = vld [vmem:[%s2] sm:$0x1]
    %vm39 = vcmask 523264
    %v41 = vsel %vm39, %v29, 0
    %43 = vmatprep.subr.mxu0 0.0
    %44 = vmatpush1.msra.mxu0 0.0
    %45 = vmatprep.subr.mxu0 0.0
    %46 = vmatpush1.msra.mxu0 0.0
    %47 = vmatprep.subr.mxu0 0.0
    %48 = vmatpush1.msra.mxu0 0.0
    %49 = vmatprep.subr.mxu0 0.0
    %50 = vmatpush1.msra.mxu0 0.0
    %51 = vmatprep.subr.mxu0 0.0
    %52 = vmatpush1.msra.mxu0 0.0
    %53 = vmatprep.subr.mxu0 0.0
    %54 = vmatpush1.msra.mxu0 0.0
    %55 = vmatprep.subr.mxu0 0.0
    %56 = vmatpush1.msra.mxu0 0.0
    %57 = vmatprep.subr.mxu0 0.0
    %58 = vmatpush1.msra.mxu0 0.0
    %59 = vmatprep.subr.mxu0 0.0
    %v60 = vand.u32 %v37, 4294901760
    %61 = vmatpush1.msra.mxu0 %v60
    %62 = vmatprep.subr.mxu0 0.0
    %v63 = vand.u32 %v36, 4294901760
    %64 = vmatpush1.msra.mxu0 %v63
    %65 = vmatprep.subr.mxu0 0.0
    %v66 = vand.u32 %v35, 4294901760
    %67 = vmatpush1.msra.mxu0 %v66
    %68 = vmatprep.subr.mxu0 0.0
    %v69 = vand.u32 %v34, 4294901760
    %70 = vmatpush1.msra.mxu0 %v69
    %71 = vmatprep.subr.mxu0 0.0
    %v72 = vand.u32 %v33, 4294901760
    %73 = vmatpush1.msra.mxu0 %v72
    %74 = vmatprep.subr.mxu0 0.0
    %v75 = vand.u32 %v32, 4294901760
    %76 = vmatpush1.msra.mxu0 %v75
    %77 = vmatprep.subr.mxu0 0.0
    %v78 = vand.u32 %v31, 4294901760
    %79 = vmatpush1.msra.mxu0 %v78
    %80 = vmatprep.subr.mxu0 0.0
    %v81 = vand.u32 %v30, 4294901760
    %82 = vmatpush1.msra.mxu0 %v81
    %83 = vmatprep.subr.mxu0 0.0
    %84 = vmatpush2.msra.mxu0 0.0
    %85 = vmatprep.subr.mxu0 0.0
    %86 = vmatpush2.msra.mxu0 0.0
    %87 = vmatprep.subr.mxu0 0.0
    %88 = vmatpush2.msra.mxu0 0.0
    %89 = vmatprep.subr.mxu0 0.0
    %90 = vmatpush2.msra.mxu0 0.0
    %91 = vmatprep.subr.mxu0 0.0
    %92 = vmatpush2.msra.mxu0 0.0
    %93 = vmatprep.subr.mxu0 0.0
    %94 = vmatpush2.msra.mxu0 0.0
    %95 = vmatprep.subr.mxu0 0.0
    %96 = vmatpush2.msra.mxu0 0.0
    %97 = vmatprep.subr.mxu0 0.0
    %98 = vmatpush2.msra.mxu0 0.0
    %99 = vmatprep.subr.mxu0 0.0
    %100 = vmatpush2.msra.mxu0 0.0
    %101 = vmatprep.subr.mxu0 0.0
    %102 = vmatpush2.msra.mxu0 0.0
    %103 = vmatprep.subr.mxu0 0.0
    %104 = vmatpush2.msra.mxu0 0.0
    %105 = vmatprep.subr.mxu0 0.0
    %106 = vmatpush2.msra.mxu0 0.0
    %107 = vmatprep.subr.mxu0 0.0
    %108 = vmatpush2.msra.mxu0 0.0
    %109 = vmatprep.subr.mxu0 0.0
    %110 = vmatpush2.msra.mxu0 0.0
    %111 = vmatprep.subr.mxu0 0.0
    %112 = vmatpush2.msra.mxu0 0.0
    %113 = vmatprep.subr.mxu0 0.0
    %114 = vmatpush2.msra.mxu0 0.0
    %115 = vmatprep.mubr.f32.mxu0 0.0
    %v116 = vand.u32 %v41, 4294901760
    %v117 = vsub.f32 %v41, %v116
    %v118 = vand.u32 %v117, 4294901760
    %v119 = vsub.f32 %v117, %v118
    %v120 = vand.u32 %v119, 4294901760
    %121 = vmatmul.mubr.f32.gmra.mxu0 %v120
    %v122 = vpop.f32.mrf.mxu0
    %v123 = vadd.f32 %v38, %v122
    %v124 = vpop.f32.mrf.mxu0
    %125 = vdwg.mxu0
    %126 = vmatprep.subr.mxu0 0.0
    %127 = vmatpush1.msra.mxu0 0.0
    %128 = vmatprep.subr.mxu0 0.0
    %129 = vmatpush1.msra.mxu0 0.0
    %130 = vmatprep.subr.mxu0 0.0
    %131 = vmatpush1.msra.mxu0 0.0
    %132 = vmatprep.subr.mxu0 0.0
    %133 = vmatpush1.msra.mxu0 0.0
    %134 = vmatprep.subr.mxu0 0.0
    %135 = vmatpush1.msra.mxu0 0.0
    %136 = vmatprep.subr.mxu0 0.0
    %137 = vmatpush1.msra.mxu0 0.0
    %138 = vmatprep.subr.mxu0 0.0
    %139 = vmatpush1.msra.mxu0 0.0
    %140 = vmatprep.subr.mxu0 0.0
    %141 = vmatpush1.msra.mxu0 0.0
    %142 = vmatprep.subr.mxu0 0.0
    %v143 = vand.u32 %v37, 4294901760
    %v144 = vsub.f32 %v37, %v143
    %v145 = vand.u32 %v144, 4294901760
    %v146 = vsub.f32 %v144, %v145
    %v147 = vand.u32 %v146, 4294901760
    %148 = vmatpush1.msra.mxu0 %v147
    %149 = vmatprep.subr.mxu0 0.0
    %v150 = vand.u32 %v36, 4294901760
    %v151 = vsub.f32 %v36, %v150
    %v152 = vand.u32 %v151, 4294901760
    %v153 = vsub.f32 %v151, %v152
    %v154 = vand.u32 %v153, 4294901760
    %155 = vmatpush1.msra.mxu0 %v154
    %156 = vmatprep.subr.mxu0 0.0
    %v157 = vand.u32 %v35, 4294901760
    %v158 = vsub.f32 %v35, %v157
    %v159 = vand.u32 %v158, 4294901760
    %v160 = vsub.f32 %v158, %v159
    %v161 = vand.u32 %v160, 4294901760
    %162 = vmatpush1.msra.mxu0 %v161
    %163 = vmatprep.subr.mxu0 0.0
    %v164 = vand.u32 %v34, 4294901760
    %v165 = vsub.f32 %v34, %v164
    %v166 = vand.u32 %v165, 4294901760
    %v167 = vsub.f32 %v165, %v166
    %v168 = vand.u32 %v167, 4294901760
    %169 = vmatpush1.msra.mxu0 %v168
    %170 = vmatprep.subr.mxu0 0.0
    %v171 = vand.u32 %v33, 4294901760
    %v172 = vsub.f32 %v33, %v171
    %v173 = vand.u32 %v172, 4294901760
    %v174 = vsub.f32 %v172, %v173
    %v175 = vand.u32 %v174, 4294901760
    %176 = vmatpush1.msra.mxu0 %v175
    %177 = vmatprep.subr.mxu0 0.0
    %v178 = vand.u32 %v32, 4294901760
    %v179 = vsub.f32 %v32, %v178
    %v180 = vand.u32 %v179, 4294901760
    %v181 = vsub.f32 %v179, %v180
    %v182 = vand.u32 %v181, 4294901760
    %183 = vmatpush1.msra.mxu0 %v182
    %184 = vmatprep.subr.mxu0 0.0
    %v185 = vand.u32 %v31, 4294901760
    %v186 = vsub.f32 %v31, %v185
    %v187 = vand.u32 %v186, 4294901760
    %v188 = vsub.f32 %v186, %v187
    %v189 = vand.u32 %v188, 4294901760
    %190 = vmatpush1.msra.mxu0 %v189
    %191 = vmatprep.subr.mxu0 0.0
    %v192 = vand.u32 %v30, 4294901760
    %v193 = vsub.f32 %v30, %v192
    %v194 = vand.u32 %v193, 4294901760
    %v195 = vsub.f32 %v193, %v194
    %v196 = vand.u32 %v195, 4294901760
    %197 = vmatpush1.msra.mxu0 %v196
    %198 = vmatprep.subr.mxu0 0.0
    %199 = vmatpush2.msra.mxu0 0.0
    %200 = vmatprep.subr.mxu0 0.0
    %201 = vmatpush2.msra.mxu0 0.0
    %202 = vmatprep.subr.mxu0 0.0
    %203 = vmatpush2.msra.mxu0 0.0
    %204 = vmatprep.subr.mxu0 0.0
    %205 = vmatpush2.msra.mxu0 0.0
    %206 = vmatprep.subr.mxu0 0.0
    %207 = vmatpush2.msra.mxu0 0.0
    %208 = vmatprep.subr.mxu0 0.0
    %209 = vmatpush2.msra.mxu0 0.0
    %210 = vmatprep.subr.mxu0 0.0
    %211 = vmatpush2.msra.mxu0 0.0
    %212 = vmatprep.subr.mxu0 0.0
    %213 = vmatpush2.msra.mxu0 0.0
    %214 = vmatprep.subr.mxu0 0.0
    %215 = vmatpush2.msra.mxu0 0.0
    %216 = vmatprep.subr.mxu0 0.0
    %217 = vmatpush2.msra.mxu0 0.0
    %218 = vmatprep.subr.mxu0 0.0
    %219 = vmatpush2.msra.mxu0 0.0
    %220 = vmatprep.subr.mxu0 0.0
    %221 = vmatpush2.msra.mxu0 0.0
    %222 = vmatprep.subr.mxu0 0.0
    %223 = vmatpush2.msra.mxu0 0.0
    %224 = vmatprep.subr.mxu0 0.0
    %225 = vmatpush2.msra.mxu0 0.0
    %226 = vmatprep.subr.mxu0 0.0
    %227 = vmatpush2.msra.mxu0 0.0
    %228 = vmatprep.subr.mxu0 0.0
    %229 = vmatpush2.msra.mxu0 0.0
    %230 = vmatprep.mubr.f32.mxu0 0.0
    %v231 = vand.u32 %v41, 4294901760
    %232 = vmatmul.mubr.f32.gmra.mxu0 %v231
    %v233 = vpop.f32.mrf.mxu0
    %v234 = vadd.f32 %v123, %v233
    %v235 = vpop.f32.mrf.mxu0
    %236 = vdwg.mxu0
    %237 = vmatprep.subr.mxu0 0.0
    %238 = vmatpush1.msra.mxu0 0.0
    %239 = vmatprep.subr.mxu0 0.0
    %240 = vmatpush1.msra.mxu0 0.0
    %241 = vmatprep.subr.mxu0 0.0
    %242 = vmatpush1.msra.mxu0 0.0
    %243 = vmatprep.subr.mxu0 0.0
    %244 = vmatpush1.msra.mxu0 0.0
    %245 = vmatprep.subr.mxu0 0.0
    %246 = vmatpush1.msra.mxu0 0.0
    %247 = vmatprep.subr.mxu0 0.0
    %248 = vmatpush1.msra.mxu0 0.0
    %249 = vmatprep.subr.mxu0 0.0
    %250 = vmatpush1.msra.mxu0 0.0
    %251 = vmatprep.subr.mxu0 0.0
    %252 = vmatpush1.msra.mxu0 0.0
    %253 = vmatprep.subr.mxu0 0.0
    %v254 = vand.u32 %v37, 4294901760
    %v255 = vsub.f32 %v37, %v254
    %256 = vmatpush1.msra.mxu0 %v255
    %257 = vmatprep.subr.mxu0 0.0
    %v258 = vand.u32 %v36, 4294901760
    %v259 = vsub.f32 %v36, %v258
    %260 = vmatpush1.msra.mxu0 %v259
    %261 = vmatprep.subr.mxu0 0.0
    %v262 = vand.u32 %v35, 4294901760
    %v263 = vsub.f32 %v35, %v262
    %264 = vmatpush1.msra.mxu0 %v263
    %265 = vmatprep.subr.mxu0 0.0
    %v266 = vand.u32 %v34, 4294901760
    %v267 = vsub.f32 %v34, %v266
    %268 = vmatpush1.msra.mxu0 %v267
    %269 = vmatprep.subr.mxu0 0.0
    %v270 = vand.u32 %v33, 4294901760
    %v271 = vsub.f32 %v33, %v270
    %272 = vmatpush1.msra.mxu0 %v271
    %273 = vmatprep.subr.mxu0 0.0
    %v274 = vand.u32 %v32, 4294901760
    %v275 = vsub.f32 %v32, %v274
    %276 = vmatpush1.msra.mxu0 %v275
    %277 = vmatprep.subr.mxu0 0.0
    %v278 = vand.u32 %v31, 4294901760
    %v279 = vsub.f32 %v31, %v278
    %280 = vmatpush1.msra.mxu0 %v279
    %281 = vmatprep.subr.mxu0 0.0
    %v282 = vand.u32 %v30, 4294901760
    %v283 = vsub.f32 %v30, %v282
    %284 = vmatpush1.msra.mxu0 %v283
    %285 = vmatprep.subr.mxu0 0.0
    %286 = vmatpush2.msra.mxu0 0.0
    %287 = vmatprep.subr.mxu0 0.0
    %288 = vmatpush2.msra.mxu0 0.0
    %289 = vmatprep.subr.mxu0 0.0
    %290 = vmatpush2.msra.mxu0 0.0
    %291 = vmatprep.subr.mxu0 0.0
    %292 = vmatpush2.msra.mxu0 0.0
    %293 = vmatprep.subr.mxu0 0.0
    %294 = vmatpush2.msra.mxu0 0.0
    %295 = vmatprep.subr.mxu0 0.0
    %296 = vmatpush2.msra.mxu0 0.0
    %297 = vmatprep.subr.mxu0 0.0
    %298 = vmatpush2.msra.mxu0 0.0
    %299 = vmatprep.subr.mxu0 0.0
    %300 = vmatpush2.msra.mxu0 0.0
    %301 = vmatprep.subr.mxu0 0.0
    %302 = vmatpush2.msra.mxu0 0.0
    %303 = vmatprep.subr.mxu0 0.0
    %304 = vmatpush2.msra.mxu0 0.0
    %305 = vmatprep.subr.mxu0 0.0
    %306 = vmatpush2.msra.mxu0 0.0
    %307 = vmatprep.subr.mxu0 0.0
    %308 = vmatpush2.msra.mxu0 0.0
    %309 = vmatprep.subr.mxu0 0.0
    %310 = vmatpush2.msra.mxu0 0.0
    %311 = vmatprep.subr.mxu0 0.0
    %312 = vmatpush2.msra.mxu0 0.0
    %313 = vmatprep.subr.mxu0 0.0
    %314 = vmatpush2.msra.mxu0 0.0
    %315 = vmatprep.subr.mxu0 0.0
    %316 = vmatpush2.msra.mxu0 0.0
    %317 = vmatprep.mubr.f32.mxu0 0.0
    %v318 = vand.u32 %v41, 4294901760
    %v319 = vsub.f32 %v41, %v318
    %320 = vmatmul.mubr.f32.gmra.mxu0 %v319
    %v321 = vpop.f32.mrf.mxu0
    %v322 = vadd.f32 %v234, %v321
    %v323 = vpop.f32.mrf.mxu0
    %324 = vdwg.mxu0
    %325 = vmatprep.subr.mxu0 0.0
    %326 = vmatpush1.msra.mxu0 0.0
    %327 = vmatprep.subr.mxu0 0.0
    %328 = vmatpush1.msra.mxu0 0.0
    %329 = vmatprep.subr.mxu0 0.0
    %330 = vmatpush1.msra.mxu0 0.0
    %331 = vmatprep.subr.mxu0 0.0
    %332 = vmatpush1.msra.mxu0 0.0
    %333 = vmatprep.subr.mxu0 0.0
    %334 = vmatpush1.msra.mxu0 0.0
    %335 = vmatprep.subr.mxu0 0.0
    %336 = vmatpush1.msra.mxu0 0.0
    %337 = vmatprep.subr.mxu0 0.0
    %338 = vmatpush1.msra.mxu0 0.0
    %339 = vmatprep.subr.mxu0 0.0
    %340 = vmatpush1.msra.mxu0 0.0
    %341 = vmatprep.subr.mxu0 0.0
    %v342 = vand.u32 %v37, 4294901760
    %343 = vmatpush1.msra.mxu0 %v342
    %344 = vmatprep.subr.mxu0 0.0
    %v345 = vand.u32 %v36, 4294901760
    %346 = vmatpush1.msra.mxu0 %v345
    %347 = vmatprep.subr.mxu0 0.0
    %v348 = vand.u32 %v35, 4294901760
    %349 = vmatpush1.msra.mxu0 %v348
    %350 = vmatprep.subr.mxu0 0.0
    %v351 = vand.u32 %v34, 4294901760
    %352 = vmatpush1.msra.mxu0 %v351
    %353 = vmatprep.subr.mxu0 0.0
    %v354 = vand.u32 %v33, 4294901760
    %355 = vmatpush1.msra.mxu0 %v354
    %356 = vmatprep.subr.mxu0 0.0
    %v357 = vand.u32 %v32, 4294901760
    %358 = vmatpush1.msra.mxu0 %v357
    %359 = vmatprep.subr.mxu0 0.0
    %v360 = vand.u32 %v31, 4294901760
    %361 = vmatpush1.msra.mxu0 %v360
    %362 = vmatprep.subr.mxu0 0.0
    %v363 = vand.u32 %v30, 4294901760
    %364 = vmatpush1.msra.mxu0 %v363
    %365 = vmatprep.subr.mxu0 0.0
    %366 = vmatpush2.msra.mxu0 0.0
    %367 = vmatprep.subr.mxu0 0.0
    %368 = vmatpush2.msra.mxu0 0.0
    %369 = vmatprep.subr.mxu0 0.0
    %370 = vmatpush2.msra.mxu0 0.0
    %371 = vmatprep.subr.mxu0 0.0
    %372 = vmatpush2.msra.mxu0 0.0
    %373 = vmatprep.subr.mxu0 0.0
    %374 = vmatpush2.msra.mxu0 0.0
    %375 = vmatprep.subr.mxu0 0.0
    %376 = vmatpush2.msra.mxu0 0.0
    %377 = vmatprep.subr.mxu0 0.0
    %378 = vmatpush2.msra.mxu0 0.0
    %379 = vmatprep.subr.mxu0 0.0
    %380 = vmatpush2.msra.mxu0 0.0
    %381 = vmatprep.subr.mxu0 0.0
    %382 = vmatpush2.msra.mxu0 0.0
    %383 = vmatprep.subr.mxu0 0.0
    %384 = vmatpush2.msra.mxu0 0.0
    %385 = vmatprep.subr.mxu0 0.0
    %386 = vmatpush2.msra.mxu0 0.0
    %387 = vmatprep.subr.mxu0 0.0
    %388 = vmatpush2.msra.mxu0 0.0
    %389 = vmatprep.subr.mxu0 0.0
    %390 = vmatpush2.msra.mxu0 0.0
    %391 = vmatprep.subr.mxu0 0.0
    %392 = vmatpush2.msra.mxu0 0.0
    %393 = vmatprep.subr.mxu0 0.0
    %394 = vmatpush2.msra.mxu0 0.0
    %395 = vmatprep.subr.mxu0 0.0
    %396 = vmatpush2.msra.mxu0 0.0
    %397 = vmatprep.mubr.f32.mxu0 0.0
    %v398 = vand.u32 %v41, 4294901760
    %v399 = vsub.f32 %v41, %v398
    %v400 = vand.u32 %v399, 4294901760
    %401 = vmatmul.mubr.f32.gmra.mxu0 %v400
    %v402 = vpop.f32.mrf.mxu0
    %v403 = vadd.f32 %v322, %v402
    %v404 = vpop.f32.mrf.mxu0
    %405 = vdwg.mxu0
    %406 = vmatprep.subr.mxu0 0.0
    %407 = vmatpush1.msra.mxu0 0.0
    %408 = vmatprep.subr.mxu0 0.0
    %409 = vmatpush1.msra.mxu0 0.0
    %410 = vmatprep.subr.mxu0 0.0
    %411 = vmatpush1.msra.mxu0 0.0
    %412 = vmatprep.subr.mxu0 0.0
    %413 = vmatpush1.msra.mxu0 0.0
    %414 = vmatprep.subr.mxu0 0.0
    %415 = vmatpush1.msra.mxu0 0.0
    %416 = vmatprep.subr.mxu0 0.0
    %417 = vmatpush1.msra.mxu0 0.0
    %418 = vmatprep.subr.mxu0 0.0
    %419 = vmatpush1.msra.mxu0 0.0
    %420 = vmatprep.subr.mxu0 0.0
    %421 = vmatpush1.msra.mxu0 0.0
    %422 = vmatprep.subr.mxu0 0.0
    %v423 = vand.u32 %v37, 4294901760
    %v424 = vsub.f32 %v37, %v423
    %v425 = vand.u32 %v424, 4294901760
    %426 = vmatpush1.msra.mxu0 %v425
    %427 = vmatprep.subr.mxu0 0.0
    %v428 = vand.u32 %v36, 4294901760
    %v429 = vsub.f32 %v36, %v428
    %v430 = vand.u32 %v429, 4294901760
    %431 = vmatpush1.msra.mxu0 %v430
    %432 = vmatprep.subr.mxu0 0.0
    %v433 = vand.u32 %v35, 4294901760
    %v434 = vsub.f32 %v35, %v433
    %v435 = vand.u32 %v434, 4294901760
    %436 = vmatpush1.msra.mxu0 %v435
    %437 = vmatprep.subr.mxu0 0.0
    %v438 = vand.u32 %v34, 4294901760
    %v439 = vsub.f32 %v34, %v438
    %v440 = vand.u32 %v439, 4294901760
    %441 = vmatpush1.msra.mxu0 %v440
    %442 = vmatprep.subr.mxu0 0.0
    %v443 = vand.u32 %v33, 4294901760
    %v444 = vsub.f32 %v33, %v443
    %v445 = vand.u32 %v444, 4294901760
    %446 = vmatpush1.msra.mxu0 %v445
    %447 = vmatprep.subr.mxu0 0.0
    %v448 = vand.u32 %v32, 4294901760
    %v449 = vsub.f32 %v32, %v448
    %v450 = vand.u32 %v449, 4294901760
    %451 = vmatpush1.msra.mxu0 %v450
    %452 = vmatprep.subr.mxu0 0.0
    %v453 = vand.u32 %v31, 4294901760
    %v454 = vsub.f32 %v31, %v453
    %v455 = vand.u32 %v454, 4294901760
    %456 = vmatpush1.msra.mxu0 %v455
    %457 = vmatprep.subr.mxu0 0.0
    %v458 = vand.u32 %v30, 4294901760
    %v459 = vsub.f32 %v30, %v458
    %v460 = vand.u32 %v459, 4294901760
    %461 = vmatpush1.msra.mxu0 %v460
    %462 = vmatprep.subr.mxu0 0.0
    %463 = vmatpush2.msra.mxu0 0.0
    %464 = vmatprep.subr.mxu0 0.0
    %465 = vmatpush2.msra.mxu0 0.0
    %466 = vmatprep.subr.mxu0 0.0
    %467 = vmatpush2.msra.mxu0 0.0
    %468 = vmatprep.subr.mxu0 0.0
    %469 = vmatpush2.msra.mxu0 0.0
    %470 = vmatprep.subr.mxu0 0.0
    %471 = vmatpush2.msra.mxu0 0.0
    %472 = vmatprep.subr.mxu0 0.0
    %473 = vmatpush2.msra.mxu0 0.0
    %474 = vmatprep.subr.mxu0 0.0
    %475 = vmatpush2.msra.mxu0 0.0
    %476 = vmatprep.subr.mxu0 0.0
    %477 = vmatpush2.msra.mxu0 0.0
    %478 = vmatprep.subr.mxu0 0.0
    %479 = vmatpush2.msra.mxu0 0.0
    %480 = vmatprep.subr.mxu0 0.0
    %481 = vmatpush2.msra.mxu0 0.0
    %482 = vmatprep.subr.mxu0 0.0
    %483 = vmatpush2.msra.mxu0 0.0
    %484 = vmatprep.subr.mxu0 0.0
    %485 = vmatpush2.msra.mxu0 0.0
    %486 = vmatprep.subr.mxu0 0.0
    %487 = vmatpush2.msra.mxu0 0.0
    %488 = vmatprep.subr.mxu0 0.0
    %489 = vmatpush2.msra.mxu0 0.0
    %490 = vmatprep.subr.mxu0 0.0
    %491 = vmatpush2.msra.mxu0 0.0
    %492 = vmatprep.subr.mxu0 0.0
    %493 = vmatpush2.msra.mxu0 0.0
    %494 = vmatprep.mubr.f32.mxu0 0.0
    %v495 = vand.u32 %v41, 4294901760
    %496 = vmatmul.mubr.f32.gmra.mxu0 %v495
    %v497 = vpop.f32.mrf.mxu0
    %v498 = vadd.f32 %v403, %v497
    %v499 = vpop.f32.mrf.mxu0
    %500 = vdwg.mxu0
    %501 = vmatprep.subr.mxu0 0.0
    %502 = vmatpush1.msra.mxu0 0.0
    %503 = vmatprep.subr.mxu0 0.0
    %504 = vmatpush1.msra.mxu0 0.0
    %505 = vmatprep.subr.mxu0 0.0
    %506 = vmatpush1.msra.mxu0 0.0
    %507 = vmatprep.subr.mxu0 0.0
    %508 = vmatpush1.msra.mxu0 0.0
    %509 = vmatprep.subr.mxu0 0.0
    %510 = vmatpush1.msra.mxu0 0.0
    %511 = vmatprep.subr.mxu0 0.0
    %512 = vmatpush1.msra.mxu0 0.0
    %513 = vmatprep.subr.mxu0 0.0
    %514 = vmatpush1.msra.mxu0 0.0
    %515 = vmatprep.subr.mxu0 0.0
    %516 = vmatpush1.msra.mxu0 0.0
    %517 = vmatprep.subr.mxu0 0.0
    %v518 = vand.u32 %v37, 4294901760
    %519 = vmatpush1.msra.mxu0 %v518
    %520 = vmatprep.subr.mxu0 0.0
    %v521 = vand.u32 %v36, 4294901760
    %522 = vmatpush1.msra.mxu0 %v521
    %523 = vmatprep.subr.mxu0 0.0
    %v524 = vand.u32 %v35, 4294901760
    %525 = vmatpush1.msra.mxu0 %v524
    %526 = vmatprep.subr.mxu0 0.0
    %v527 = vand.u32 %v34, 4294901760
    %528 = vmatpush1.msra.mxu0 %v527
    %529 = vmatprep.subr.mxu0 0.0
    %v530 = vand.u32 %v33, 4294901760
    %531 = vmatpush1.msra.mxu0 %v530
    %532 = vmatprep.subr.mxu0 0.0
    %v533 = vand.u32 %v32, 4294901760
    %534 = vmatpush1.msra.mxu0 %v533
    %535 = vmatprep.subr.mxu0 0.0
    %v536 = vand.u32 %v31, 4294901760
    %537 = vmatpush1.msra.mxu0 %v536
    %538 = vmatprep.subr.mxu0 0.0
    %v539 = vand.u32 %v30, 4294901760
    %540 = vmatpush1.msra.mxu0 %v539
    %541 = vmatprep.subr.mxu0 0.0
    %542 = vmatpush2.msra.mxu0 0.0
    %543 = vmatprep.subr.mxu0 0.0
    %544 = vmatpush2.msra.mxu0 0.0
    %545 = vmatprep.subr.mxu0 0.0
    %546 = vmatpush2.msra.mxu0 0.0
    %547 = vmatprep.subr.mxu0 0.0
    %548 = vmatpush2.msra.mxu0 0.0
    %549 = vmatprep.subr.mxu0 0.0
    %550 = vmatpush2.msra.mxu0 0.0
    %551 = vmatprep.subr.mxu0 0.0
    %552 = vmatpush2.msra.mxu0 0.0
    %553 = vmatprep.subr.mxu0 0.0
    %554 = vmatpush2.msra.mxu0 0.0
    %555 = vmatprep.subr.mxu0 0.0
    %556 = vmatpush2.msra.mxu0 0.0
    %557 = vmatprep.subr.mxu0 0.0
    %558 = vmatpush2.msra.mxu0 0.0
    %559 = vmatprep.subr.mxu0 0.0
    %560 = vmatpush2.msra.mxu0 0.0
    %561 = vmatprep.subr.mxu0 0.0
    %562 = vmatpush2.msra.mxu0 0.0
    %563 = vmatprep.subr.mxu0 0.0
    %564 = vmatpush2.msra.mxu0 0.0
    %565 = vmatprep.subr.mxu0 0.0
    %566 = vmatpush2.msra.mxu0 0.0
    %567 = vmatprep.subr.mxu0 0.0
    %568 = vmatpush2.msra.mxu0 0.0
    %569 = vmatprep.subr.mxu0 0.0
    %570 = vmatpush2.msra.mxu0 0.0
    %571 = vmatprep.subr.mxu0 0.0
    %572 = vmatpush2.msra.mxu0 0.0
    %573 = vmatprep.mubr.f32.mxu0 0.0
    %v574 = vand.u32 %v41, 4294901760
    %575 = vmatmul.mubr.f32.gmra.mxu0 %v574
    %v576 = vpop.f32.mrf.mxu0
    %v577 = vadd.f32 %v498, %v576
    %v578 = vpop.f32.mrf.mxu0
    %579 = vdwg.mxu0
    %vm580 = vcmask 8192
    %581 = vst.msk [vmem:[#allocation5] sm:$0x1] %vm580, %v577
    // Predicated region
    $region18: #{test_net_forward.1} parent=1 // pred_check
      _
    $region19: #{test_net_forward.1} parent=1 // pred_check_branch
      %583 = sbr.rel (0) target = $region21
    $region20: #{test_net_forward.1} parent=1 // pred_region
      %s585 = ssub.s32 16, 16
      %586 = vsyncadd [#allocation4], %s585
      %s588 = sshll.u32 [#allocation5], 4
      %s589 = int_to_ptr.vmem [resolvable:$true] %s588
      %591 = dma.vmem_to_hbm [thread:$0]  %s589, 16, %s3, [#allocation4]
    $region21: #{test_net_forward.1} parent=1 // pred_fallthru
      _
    // Predicated region
    $region22: #{test_net_forward.1} parent=1 // pred_check
      _
    $region23: #{test_net_forward.1} parent=1 // pred_check_branch
      %593 = sbr.rel (0) target = $region25
    $region24: #{test_net_forward.1} parent=1 // pred_region
      %594 = dma.done [#allocation4], 16
    $region25: #{test_net_forward.1} parent=1 // pred_fallthru
      _
    %595 = vsyncpa [#allocation3], 1
    %596 = vsyncpa [#allocation4], 1

</llo_original>
